<compile_context>
chip_gen: v7x
topology: tpu7x:2x2x1
jax: 0.10.0
libtpu: 0.0.40
codegen_flags: <defaults>
</compile_context>

<pallas_src>
import functools
import math

import jax
import jax.numpy as jnp
from jax.experimental import pallas as pl
from jax.experimental.pallas import tpu as pltpu

LANE = 128                 # vreg lane width
ACC_ROWS = 32              # accumulator sublane width -> 4 independent add chains
MAX_ROWS_PER_TILE = 8192   # 8192 * 128 * 4 B = 4 MiB per f32 input block


def _cdiv(a, b):
    return -(-a // b)


def _round_up(a, b):
    return _cdiv(a, b) * b


def _dice_kernel(pred_ref, tgt_ref, out_ref, acc_int_ref, acc_uni_ref,
                 *, r_tile, n_valid, needs_mask):
    """Grid = (num_splits, B, chunks_per_split).

    pred_ref / tgt_ref: (r_tile, 128) blocks of the flattened feature axis,
    streamed at native dtype and upcast to f32 in vregs.
    out_ref: (1, 1, 2) SMEM block with this (batch, split)'s partial
    (intersection, union).
    """
    s = pl.program_id(0)
    c = pl.program_id(2)
    n_c = pl.num_programs(2)

    @pl.when(c == 0)
    def _init():
        acc_int_ref[...] = jnp.zeros_like(acc_int_ref)
        acc_uni_ref[...] = jnp.zeros_like(acc_uni_ref)

    # Hot path: sigmoid (EUP) + elementwise mul/add (VALU); HBM-bandwidth bound.
    p = jax.nn.sigmoid(pred_ref[...].astype(jnp.float32))   # (r_tile, 128)
    t = tgt_ref[...].astype(jnp.float32)

    if needs_mask:
        # Ragged tail / partial boundary block / dead split chunk: zero every
        # element whose global flattened index (per batch element) is >= N.
        # The chunk index uses the *unclamped* split offset so dead chunks
        # (index_map clamped onto a real block) contribute exactly zero.
        chunk = s * n_c + c
        row = jax.lax.broadcasted_iota(jnp.int32, (r_tile, LANE), 0)
        lane = jax.lax.broadcasted_iota(jnp.int32, (r_tile, LANE), 1)
        gidx = (chunk * r_tile + row) * LANE + lane
        valid = gidx < n_valid
        p = jnp.where(valid, p, 0.0)
        t = jnp.where(valid, t, 0.0)

    def fold(x):  # (r_tile, 128) -> (ACC_ROWS, 128): leading-axis adds only
        return x.reshape(r_tile // ACC_ROWS, ACC_ROWS, LANE).sum(axis=0)

    acc_int_ref[...] += fold(p * t)        # -> intersection partials
    acc_uni_ref[...] += fold(p + t)        # -> union partials

    @pl.when(c == n_c - 1)
    def _finalize():
        out_ref[0, 0, 0] = jnp.sum(acc_int_ref[...])
        out_ref[0, 0, 1] = jnp.sum(acc_uni_ref[...])


def dice_loss(pred, target, eps: float = 1e-7,
              max_rows_per_tile: int = MAX_ROWS_PER_TILE,
              core_splits=None):
    """pred, target: [B, 1, H, W] logits / mask (NCHW). Returns scalar f32 loss."""
    assert pred.ndim == 4 and pred.shape == target.shape, (pred.shape, target.shape)
    B = pred.shape[0]
    N = int(math.prod(pred.shape[1:]))

    # Lane/sublane-dense tiling of the flattened feature axis.
    rows = _cdiv(N, LANE)
    num_chunks = _cdiv(rows, max_rows_per_tile)
    # Multiple of 32: satisfies sublane tiling for f32 (8), bf16 (16), int8 (32)
    # and keeps r_tile divisible by ACC_ROWS.
    r_tile = _round_up(_cdiv(rows, num_chunks), ACC_ROWS)
    num_chunks = _cdiv(rows, r_tile)

    # v7x megacore: with a single batch element the second TensorCore would
    # idle, so split the chunk range over a leading parallel axis.  Harmless
    # on single-core v5e/v6e.
    if core_splits is None:
        core_splits = 2 if (B == 1 and num_chunks >= 2) else 1
    num_splits = max(1, int(core_splits))
    cps = _cdiv(num_chunks, num_splits)          # chunks per split
    # Any padding anywhere (ragged lane tail, partial last chunk, dead chunks
    # from the split) is handled by the in-kernel validity mask.
    needs_mask = (num_splits * cps * r_tile * LANE) != N

    p_flat = pred.reshape(B, N)      # metadata-only reshape, native dtype
    t_flat = target.reshape(B, N)
    if N % LANE != 0:
        # TODO(synk): N not a multiple of 128 needs one cheap zero-pad pass so
        # the (rows, 128) reshape is well-formed; pad values are masked in-kernel.
        pad = rows * LANE - N
        p_flat = jnp.pad(p_flat, ((0, 0), (0, pad)))
        t_flat = jnp.pad(t_flat, ((0, 0), (0, pad)))
    p3 = p_flat.reshape(B, rows, LANE)
    t3 = t_flat.reshape(B, rows, LANE)

    # 2 pipeline buffers x (both input blocks) + headroom for scratch/internal.
    block_bytes = r_tile * LANE * (p3.dtype.itemsize + t3.dtype.itemsize)
    vmem_limit = int(min(32 * 1024 * 1024,
                         max(4 * 1024 * 1024, 2 * block_bytes + 2 * 1024 * 1024)))

    if num_splits * cps == num_chunks:
        def idx_in(s, b, c):
            return (b, s * cps + c, 0)
    else:
        def idx_in(s, b, c):
            # Clamp dead chunks onto a real block; the kernel mask zeroes them.
            return (b, jnp.minimum(s * cps + c, num_chunks - 1), 0)

    partials = pl.pallas_call(
        functools.partial(_dice_kernel, r_tile=r_tile, n_valid=N,
                          needs_mask=needs_mask),
        out_shape=jax.ShapeDtypeStruct((B, num_splits, 2), jnp.float32),
        grid=(num_splits, B, cps),
        in_specs=[
            pl.BlockSpec((None, r_tile, LANE), idx_in),
            pl.BlockSpec((None, r_tile, LANE), idx_in),
        ],
        out_specs=pl.BlockSpec((1, 1, 2), lambda s, b, c: (b, s, 0),
                               memory_space=pltpu.MemorySpace.SMEM),
        scratch_shapes=[
            pltpu.VMEM((ACC_ROWS, LANE), jnp.float32),   # intersection partials
            pltpu.VMEM((ACC_ROWS, LANE), jnp.float32),   # union partials
        ],
        compiler_params=pltpu.CompilerParams(
            dimension_semantics=("parallel", "parallel", "arbitrary"),
            vmem_limit_bytes=vmem_limit),
    )(p3, t3)

    intersection = jnp.sum(partials[:, :, 0], axis=1)
    union = jnp.sum(partials[:, :, 1], axis=1)
    dice = (2.0 * intersection + eps) / (union + eps)
    return 1.0 - jnp.mean(dice)


def dice_loss_ref(pred, target, eps: float = 1e-7):
    """Pure-JAX reference mirroring the PyTorch forward (f32 math)."""
    p = jax.nn.sigmoid(pred.astype(jnp.float32)).reshape(pred.shape[0], -1)
    t = target.astype(jnp.float32).reshape(target.shape[0], -1)
    intersection = jnp.sum(p * t, axis=1)
    union = jnp.sum(p, axis=1) + jnp.sum(t, axis=1)
    dice = (2.0 * intersection + eps) / (union + eps)
    return 1.0 - jnp.mean(dice)


if __name__ == "__main__":
    key = jax.random.PRNGKey(0)
    ks = jax.random.split(key, 8)

    def check(name, pred, target, **kw):
        loss = jax.jit(functools.partial(dice_loss, **kw))(pred, target)
        jax.block_until_ready(loss)
        ref = dice_loss_ref(pred, target)
        assert jnp.allclose(loss, ref, atol=3e-5, rtol=3e-5), (name, loss, ref)

    # Case 1: the module's [B, 1, H, W] convention at a small shape
    # (exercises the partial-boundary-block masking path).
    p1 = jax.random.normal(ks[0], (2, 1, 16, 16), dtype=jnp.float32)
    t1 = (jax.random.uniform(ks[1], (2, 1, 16, 16)) > 0.5).astype(jnp.float32)
    check("basic", p1, t1)

    # Case 2: multiple feature chunks -> exercises the VMEM accumulator loop.
    p2 = jax.random.normal(ks[2], (2, 1, 128, 128), dtype=jnp.float32)
    t2 = (jax.random.uniform(ks[3], (2, 1, 128, 128)) > 0.5).astype(jnp.float32)
    check("multichunk", p2, t2, max_rows_per_tile=32)

    # Case 3: B=1 -> chunk range split over the leading parallel axis
    # (v7x megacore path) with a partial last chunk and a clamped dead chunk.
    p3 = jax.random.normal(ks[4], (1, 1, 160, 160), dtype=jnp.float32)
    t3 = (jax.random.uniform(ks[5], (1, 1, 160, 160)) > 0.5).astype(jnp.float32)
    check("split", p3, t3, max_rows_per_tile=32)

    # Case 4: native bf16 streaming + feature size not a multiple of 128.
    p4 = jax.random.normal(ks[6], (2, 1, 20, 20), dtype=jnp.float32).astype(jnp.bfloat16)
    t4 = (jax.random.uniform(ks[7], (2, 1, 20, 20)) > 0.5).astype(jnp.bfloat16)
    check("bf16_ragged", p4, t4)

    print("KERNEL_OK")
</pallas_src>

<mosaic_0001>
module attributes {stable_mosaic.version = 11 : i64} {
  func.func @_dice_kernel(%arg0: i32, %arg1: i32, %arg2: i32, %arg3: memref<1x32x128xf32, #tpu.memory_space<vmem>>, %arg4: memref<1x32x128xf32, #tpu.memory_space<vmem>>, %arg5: memref<1x1x2xf32, #tpu.memory_space<smem>>, %arg6: memref<32x128xf32, #tpu.memory_space<vmem>>, %arg7: memref<32x128xf32, #tpu.memory_space<vmem>>) attributes {dimension_semantics = [#tpu.dimension_semantics<parallel>, #tpu.dimension_semantics<parallel>, #tpu.dimension_semantics<arbitrary>], iteration_bounds = array<i64: 1, 2, 1>, scalar_prefetch = 0 : i64, scratch_operands = 2 : i64, tpu.core_type = #tpu.core_type<tc>, window_params = [{transform_indices = @transform_0, window_bounds = array<i64: 1, 32, 128>}, {transform_indices = @transform_1, window_bounds = array<i64: 1, 32, 128>}, {transform_indices = @transform_2, window_bounds = array<i64: 1, 1, 2>}]} {
    %c0_i32 = arith.constant 0 : i32
    %0 = arith.cmpi eq, %arg2, %c0_i32 : i32
    %1 = arith.extui %0 : i1 to i32
    %c0_i32_0 = arith.constant 0 : i32
    %2 = arith.cmpi ne, %1, %c0_i32_0 : i32
    scf.if %2 {
      %cst_20 = arith.constant 0.000000e+00 : f32
      %43 = vector.broadcast %cst_20 : f32 to vector<32x128xf32>
      %c0_21 = arith.constant 0 : index
      %c0_22 = arith.constant 0 : index
      %44 = vector.load %arg6[%c0_21, %c0_22] : memref<32x128xf32, #tpu.memory_space<vmem>>, vector<32x128xf32>
      tpu.vector_store %arg6[%c0_21, %c0_22], %43 {strides = array<i32>} : memref<32x128xf32, #tpu.memory_space<vmem>>, vector<32x128xf32>,
      %cst_23 = arith.constant 0.000000e+00 : f32
      %45 = vector.broadcast %cst_23 : f32 to vector<32x128xf32>
      %c0_24 = arith.constant 0 : index
      %c0_25 = arith.constant 0 : index
      %46 = vector.load %arg7[%c0_24, %c0_25] : memref<32x128xf32, #tpu.memory_space<vmem>>, vector<32x128xf32>
      tpu.vector_store %arg7[%c0_24, %c0_25], %45 {strides = array<i32>} : memref<32x128xf32, #tpu.memory_space<vmem>>, vector<32x128xf32>,
    } else {
    }
    %c0 = arith.constant 0 : index
    %c0_1 = arith.constant 0 : index
    %c0_2 = arith.constant 0 : index
    %3 = vector.load %arg3[%c0, %c0_1, %c0_2] : memref<1x32x128xf32, #tpu.memory_space<vmem>>, vector<1x32x128xf32>
    %4 = vector.shape_cast %3 : vector<1x32x128xf32> to vector<32x128xf32>
    %5 = arith.negf %4 : vector<32x128xf32>
    %6 = math.exp %5 : vector<32x128xf32>
    %cst = arith.constant 1.000000e+00 : f32
    %7 = vector.broadcast %cst : f32 to vector<32x128xf32>
    %8 = arith.addf %7, %6 : vector<32x128xf32>
    %9 = arith.divf %7, %8 : vector<32x128xf32>
    %c0_3 = arith.constant 0 : index
    %c0_4 = arith.constant 0 : index
    %c0_5 = arith.constant 0 : index
    %10 = vector.load %arg4[%c0_3, %c0_4, %c0_5] : memref<1x32x128xf32, #tpu.memory_space<vmem>>, vector<1x32x128xf32>
    %11 = vector.shape_cast %10 : vector<1x32x128xf32> to vector<32x128xf32>
    %c1_i32 = arith.constant 1 : i32
    %12 = arith.muli %arg0, %c1_i32 : i32
    %13 = arith.addi %12, %arg2 : i32
    %14 = tpu.iota {dimensions = array<i32: 0>} : vector<32x128xi32>
    %15 = tpu.iota {dimensions = array<i32: 1>} : vector<32x128xi32>
    %c32_i32 = arith.constant 32 : i32
    %16 = arith.muli %13, %c32_i32 : i32
    %17 = vector.broadcast %16 : i32 to vector<32x128xi32>
    %18 = arith.addi %17, %14 : vector<32x128xi32>
    %c128_i32 = arith.constant 128 : i32
    %19 = vector.broadcast %c128_i32 : i32 to vector<32x128xi32>
    %20 = arith.muli %18, %19 : vector<32x128xi32>
    %21 = arith.addi %20, %15 : vector<32x128xi32>
    %c256_i32 = arith.constant 256 : i32
    %22 = vector.broadcast %c256_i32 : i32 to vector<32x128xi32>
    %23 = arith.cmpi slt, %21, %22 : vector<32x128xi32>
    %cst_6 = arith.constant 0.000000e+00 : f32
    %24 = vector.broadcast %cst_6 : f32 to vector<32x128xf32>
    %25 = arith.select %23, %9, %24 : vector<32x128xi1>, vector<32x128xf32>
    %cst_7 = arith.constant 0.000000e+00 : f32
    %26 = vector.broadcast %cst_7 : f32 to vector<32x128xf32>
    %27 = arith.select %23, %11, %26 : vector<32x128xi1>, vector<32x128xf32>
    %c0_8 = arith.constant 0 : index
    %c0_9 = arith.constant 0 : index
    %28 = vector.load %arg6[%c0_8, %c0_9] : memref<32x128xf32, #tpu.memory_space<vmem>>, vector<32x128xf32>
    %29 = arith.mulf %25, %27 : vector<32x128xf32>
    %30 = vector.shape_cast %29 : vector<32x128xf32> to vector<1x32x128xf32>
    %cst_10 = arith.constant dense<0.000000e+00> : vector<32x128xf32>
    %31 = vector.multi_reduction <add>, %30, %cst_10 [0] : vector<1x32x128xf32> to vector<32x128xf32>
    %32 = arith.addf %28, %31 : vector<32x128xf32>
    %c0_11 = arith.constant 0 : index
    %c0_12 = arith.constant 0 : index
    %33 = vector.load %arg6[%c0_11, %c0_12] : memref<32x128xf32, #tpu.memory_space<vmem>>, vector<32x128xf32>
    tpu.vector_store %arg6[%c0_11, %c0_12], %32 {strides = array<i32>} : memref<32x128xf32, #tpu.memory_space<vmem>>, vector<32x128xf32>,
    %c0_13 = arith.constant 0 : index
    %c0_14 = arith.constant 0 : index
    %34 = vector.load %arg7[%c0_13, %c0_14] : memref<32x128xf32, #tpu.memory_space<vmem>>, vector<32x128xf32>
    %35 = arith.addf %25, %27 : vector<32x128xf32>
    %36 = vector.shape_cast %35 : vector<32x128xf32> to vector<1x32x128xf32>
    %cst_15 = arith.constant dense<0.000000e+00> : vector<32x128xf32>
    %37 = vector.multi_reduction <add>, %36, %cst_15 [0] : vector<1x32x128xf32> to vector<32x128xf32>
    %38 = arith.addf %34, %37 : vector<32x128xf32>
    %c0_16 = arith.constant 0 : index
    %c0_17 = arith.constant 0 : index
    %39 = vector.load %arg7[%c0_16, %c0_17] : memref<32x128xf32, #tpu.memory_space<vmem>>, vector<32x128xf32>
    tpu.vector_store %arg7[%c0_16, %c0_17], %38 {strides = array<i32>} : memref<32x128xf32, #tpu.memory_space<vmem>>, vector<32x128xf32>,
    %c0_i32_18 = arith.constant 0 : i32
    %40 = arith.cmpi eq, %arg2, %c0_i32_18 : i32
    %41 = arith.extui %40 : i1 to i32
    %c0_i32_19 = arith.constant 0 : i32
    %42 = arith.cmpi ne, %41, %c0_i32_19 : i32
    scf.if %42 {
      %c0_20 = arith.constant 0 : index
      %c0_21 = arith.constant 0 : index
      %43 = vector.load %arg6[%c0_20, %c0_21] : memref<32x128xf32, #tpu.memory_space<vmem>>, vector<32x128xf32>
      %44 = vector.shape_cast %43 : vector<32x128xf32> to vector<1x32x128xf32>
      %cst_22 = arith.constant dense<0.000000e+00> : vector<1xf32>
      %45 = vector.multi_reduction <add>, %44, %cst_22 [1, 2] : vector<1x32x128xf32> to vector<1xf32>
      %46 = vector.shape_cast %45 : vector<1xf32> to vector<1x1x1xf32>
      %47 = vector.extract %46[0, 0, 0] : f32 from vector<1x1x1xf32>
      %c0_23 = arith.constant 0 : index
      %c0_24 = arith.constant 0 : index
      %c0_25 = arith.constant 0 : index
      %48 = memref.load %arg5[%c0_23, %c0_24, %c0_25] : memref<1x1x2xf32, #tpu.memory_space<smem>>
      memref.store %47, %arg5[%c0_23, %c0_24, %c0_25] : memref<1x1x2xf32, #tpu.memory_space<smem>>
      %c0_26 = arith.constant 0 : index
      %c0_27 = arith.constant 0 : index
      %49 = vector.load %arg7[%c0_26, %c0_27] : memref<32x128xf32, #tpu.memory_space<vmem>>, vector<32x128xf32>
      %50 = vector.shape_cast %49 : vector<32x128xf32> to vector<1x32x128xf32>
      %cst_28 = arith.constant dense<0.000000e+00> : vector<1xf32>
      %51 = vector.multi_reduction <add>, %50, %cst_28 [1, 2] : vector<1x32x128xf32> to vector<1xf32>
      %52 = vector.shape_cast %51 : vector<1xf32> to vector<1x1x1xf32>
      %53 = vector.extract %52[0, 0, 0] : f32 from vector<1x1x1xf32>
      %c0_29 = arith.constant 0 : index
      %c0_30 = arith.constant 0 : index
      %c1 = arith.constant 1 : index
      %54 = memref.load %arg5[%c0_29, %c0_30, %c1] : memref<1x1x2xf32, #tpu.memory_space<smem>>
      memref.store %53, %arg5[%c0_29, %c0_30, %c1] : memref<1x1x2xf32, #tpu.memory_space<smem>>
    } else {
    }
    return
  }
  func.func @transform_0(%arg0: i32, %arg1: i32, %arg2: i32) -> (i32, i32, i32) {
    %c1_i32 = arith.constant 1 : i32
    %0 = arith.muli %arg0, %c1_i32 : i32
    %1 = arith.addi %0, %arg2 : i32
    %c0_i32 = arith.constant 0 : i32
    %c0_i32_0 = arith.constant 0 : i32
    return %arg1, %1, %c0_i32 : i32, i32, i32
  }
  func.func @transform_1(%arg0: i32, %arg1: i32, %arg2: i32) -> (i32, i32, i32) {
    %c1_i32 = arith.constant 1 : i32
    %0 = arith.muli %arg0, %c1_i32 : i32
    %1 = arith.addi %0, %arg2 : i32
    %c0_i32 = arith.constant 0 : i32
    %c0_i32_0 = arith.constant 0 : i32
    return %arg1, %1, %c0_i32 : i32, i32, i32
  }
  func.func @transform_2(%arg0: i32, %arg1: i32, %arg2: i32) -> (i32, i32, i32) {
    %c0_i32 = arith.constant 0 : i32
    %c0_i32_0 = arith.constant 0 : i32
    return %arg1, %arg0, %c0_i32 : i32, i32, i32
  }
}

</mosaic_0001>

<llo_original>
// kernel: dice_loss.1
$region0: #{dice_loss.1}
  #allocation0 [shape = 'u32[]', space=smem, size = 0x4, offset = 0x4, fixed_abs, tag = 'smem constant byte address 0x4 - core index']
  #allocation1 [shape = 'u32[144,128]{1,0:T(1,128)}', space=vmem, size = 0x12000, scoped, tag = 'internal scratch']
  #allocation2 [shape = 'f32[32,128]{1,0:T(8,128)}', space=vmem, size = 0x4000, scoped, tag = 'scratch operand']
  #allocation3 [shape = 'f32[32,128]{1,0:T(8,128)}', space=vmem, size = 0x4000, scoped, tag = 'scratch operand']
  %s0 = inlined_call_operand.vmem [shape: f32[2,2,128], index: 0, kind: input, shape index: {}]
  %s1 = inlined_call_operand.vmem [shape: f32[2,2,128], index: 1, kind: input, shape index: {}]
  %s2 = inlined_call_operand.vmem [shape: f32[2,1,2], index: 2, kind: output, shape index: {}]
  %s3 = sld [smem:[#allocation0]]
  $region49: #{dice_loss.1} parent=0
    _
  %s5 = ssub.s32 1, %s3
  %s6 = scalar_select 0, %s5, %s3
  $region1: #{dice_loss.1} parent=0
    #allocation4 [shape = 'u8[1024]{0}', space=smem, size = 0x400, scoped, tag = 'output window, operand 0']
    #allocation5 [shape = 's32[2]{0}', space=sflag, size = 0x8, scoped, tag = 'scoped memory for dice_loss.1']
    %7 = vsyncpa [#allocation5], 0
    %s8 = scalar_lea.sflag [#allocation5], 1
    %9 = vsyncpa %s8, 0
    loop: start=0, step=1, limit=4
    $region2: #{dice_loss.1} parent=1 // loop_pre_header
      _
    $region3: #{dice_loss.1} parent=1 // loop_header
      %s11 = sphi 0, %s15
      %p12 = scmp.ge.s32.totalorder %s11, 4
      %s18 = sphi 0, %s37
      %s19 = sphi 0, %s33
      %s20 = sphi 0, %s29
      %s21 = sphi 0, %s18
      %s22 = sphi 0, %s19
      %s23 = sphi 0, %s20
      %s24 = sphi 0, %s21
      %s25 = sphi 0, %s22
      %s26 = sphi 0, %s23
      %s44 = sphi 0, %s46
      %s47 = sphi 0, %s44
      %s48 = sphi 0, %s47
      %s64 = sphi 0, %s48
      %s74 = sphi 0, %s76
      %s77 = sphi 0, %s74
      %s78 = sphi 0, %s77
      %s94 = sphi 0, %s78
      %s102 = sphi 0, %s104
      %s105 = sphi 0, %s102
      %s106 = sphi 0, %s105
      %s122 = sphi 0, %s106
    $region4: #{dice_loss.1} parent=1 // loop_header_branch
      %14 = sbr.rel (%p12) target = $region8
    $region5: #{dice_loss.1} parent=1 // loop_body
      %s16 = ssub.s32 %s11, 1
      %s17 = ssub.s32 %s11, 2
      %s27 = sadd.s32 1, %s20
      %p28 = scmp.ge.s32.totalorder %s27, 1
      %s29 = scalar_select %p28, 0, %s27
      %s30 = sadd.s32 1, %s19
      %s31 = scalar_select %p28, %s30, %s19
      %p32 = scmp.ge.s32.totalorder %s31, 2
      %s33 = scalar_select %p32, 0, %s31
      %s34 = sadd.s32 1, %s18
      %s35 = scalar_select %p32, %s34, %s18
      %p36 = scmp.ge.s32.totalorder %s35, 1
      %s37 = scalar_select %p36, 0, %s35
      %s38 = sadd.s32 %s18, %s20
      %s39 = sadd.s32 %s37, %s29
      %s40 = ssub.s32 %s19, %s33
      %s41 = ssub.s32 %s38, %s39
      %s42 = sor.u32 %s40, %s41
      %p43 = scmp.eq.s32.totalorder %s42, 0
      %s45 = sadd.s32 %s44, 1
      %s46 = scalar_select %p43, %s44, %s45
      %p49 = pneg %p43
      %p50 = scmp.eq.s32.totalorder %s11, 1
      %p51 = por %p49, %p50
      %p52 = scmp.ne.s32.totalorder %s44, %s47
      %p53 = scmp.eq.s32.totalorder %s11, 0
      %p54 = por %p52, %p53
      %p55 = scmp.ne.s32.totalorder %s44, %s47
      %p56 = scmp.eq.s32.totalorder %s16, 1
      %p57 = por %p55, %p56
      %p58 = scmp.ne.s32.totalorder %s47, %s48
      %p59 = scmp.eq.s32.totalorder %s16, 0
      %p60 = por %p58, %p59
      %p61 = scmp.ne.s32.totalorder %s47, %s48
      %p62 = scmp.eq.s32.totalorder %s17, 1
      %p63 = por %p61, %p62
      %p65 = scmp.ne.s32.totalorder %s48, %s64
      %p66 = scmp.eq.s32.totalorder %s17, 0
      %p67 = por %p65, %p66
      %s68 = sadd.s32 %s18, %s20
      %s69 = sadd.s32 %s37, %s29
      %s70 = ssub.s32 %s19, %s33
      %s71 = ssub.s32 %s68, %s69
      %s72 = sor.u32 %s70, %s71
      %p73 = scmp.eq.s32.totalorder %s72, 0
      %s75 = sadd.s32 %s74, 1
      %s76 = scalar_select %p73, %s74, %s75
      %p79 = pneg %p73
      %p80 = scmp.eq.s32.totalorder %s11, 1
      %p81 = por %p79, %p80
      %p82 = scmp.ne.s32.totalorder %s74, %s77
      %p83 = scmp.eq.s32.totalorder %s11, 0
      %p84 = por %p82, %p83
      %p85 = scmp.ne.s32.totalorder %s74, %s77
      %p86 = scmp.eq.s32.totalorder %s16, 1
      %p87 = por %p85, %p86
      %p88 = scmp.ne.s32.totalorder %s77, %s78
      %p89 = scmp.eq.s32.totalorder %s16, 0
      %p90 = por %p88, %p89
      %p91 = scmp.ne.s32.totalorder %s77, %s78
      %p92 = scmp.eq.s32.totalorder %s17, 1
      %p93 = por %p91, %p92
      %p95 = scmp.ne.s32.totalorder %s78, %s94
      %p96 = scmp.eq.s32.totalorder %s17, 0
      %p97 = por %p95, %p96
      %s98 = ssub.s32 %s19, %s33
      %s99 = ssub.s32 %s18, %s37
      %s100 = sor.u32 %s98, %s99
      %p101 = scmp.eq.s32.totalorder %s100, 0
      %s103 = sadd.s32 %s102, 1
      %s104 = scalar_select %p101, %s102, %s103
      %p107 = pneg %p101
      %p108 = scmp.eq.s32.totalorder %s11, 1
      %p109 = por %p107, %p108
      %p110 = scmp.ne.s32.totalorder %s102, %s105
      %p111 = scmp.eq.s32.totalorder %s11, 0
      %p112 = por %p110, %p111
      %p113 = scmp.ne.s32.totalorder %s102, %s105
      %p114 = scmp.eq.s32.totalorder %s16, 1
      %p115 = por %p113, %p114
      %p116 = scmp.ne.s32.totalorder %s105, %s106
      %p117 = scmp.eq.s32.totalorder %s16, 0
      %p118 = por %p116, %p117
      %p119 = scmp.ne.s32.totalorder %s105, %s106
      %p120 = scmp.eq.s32.totalorder %s17, 1
      %p121 = por %p119, %p120
      %p123 = scmp.ne.s32.totalorder %s106, %s122
      %p124 = scmp.eq.s32.totalorder %s17, 0
      %p125 = por %p123, %p124
      %p126 = scmp.le.s32.totalorder 1, %s11
      %p127 = scmp.lt.s32.totalorder %s11, 3
      %p128 = pnand %p126, %p127
      %p129 = pneg %p128
      // Predicated region
      $region9: #{dice_loss.1} parent=5 // pred_check
        _
      $region10: #{dice_loss.1} parent=5 // pred_check_branch
        %131 = sbr.rel (%p128) target = $region12
      $region11: #{dice_loss.1} parent=5 // pred_region
        %s132 = ssub.s32 %s11, 1
      $region12: #{dice_loss.1} parent=5 // pred_fallthru
        _
      %p133 = scmp.lt.s32.totalorder %s11, 2
      // Predicated region
      $region13: #{dice_loss.1} parent=5 // pred_check
        %p134 = pneg %p133
      $region14: #{dice_loss.1} parent=5 // pred_check_branch
        %136 = sbr.rel (%p134) target = $region16
      $region15: #{dice_loss.1} parent=5 // pred_region
        // Predicated region
        $region17: #{dice_loss.1} parent=15 // pred_check
          %p137 = pneg %p54
        $region18: #{dice_loss.1} parent=15 // pred_check_branch
          %139 = sbr.rel (%p137) target = $region20
        $region19: #{dice_loss.1} parent=15 // pred_region
          %s140 = sadd.s32 %s18, %s20
          %s141 = smul.u32 16, %s140
          %s142 = ssub.s32 1, %s141
          %s143 = smul.u32 32, %s142
          %p144 = scmp.lt.s32.totalorder %s19, 1
          %s145 = scalar_select %p144, %s19, 1
          %p146 = scmp.lt.s32.totalorder %s141, 0
          %s147 = scalar_select %p146, %s141, 0
          %s148 = sadd.s32 %s147, %s145
          %s149 = smul.addr %s148, 2
          %s150 = scalar_lea.vmem %s0, %s149
          %s151 = sadd.s32 %s18, %s20
          %s152 = smul.u32 16, %s151
          %s153 = ssub.s32 1, %s152
          %s154 = smul.u32 32, %s153
        $region20: #{dice_loss.1} parent=15 // pred_fallthru
          _
        // Predicated region
        $region21: #{dice_loss.1} parent=15 // pred_check
          %p155 = pneg %p84
        $region22: #{dice_loss.1} parent=15 // pred_check_branch
          %157 = sbr.rel (%p155) target = $region24
        $region23: #{dice_loss.1} parent=15 // pred_region
          %s158 = sadd.s32 %s18, %s20
          %s159 = smul.u32 16, %s158
          %s160 = ssub.s32 1, %s159
          %s161 = smul.u32 32, %s160
          %p162 = scmp.lt.s32.totalorder %s19, 1
          %s163 = scalar_select %p162, %s19, 1
          %p164 = scmp.lt.s32.totalorder %s159, 0
          %s165 = scalar_select %p164, %s159, 0
          %s166 = sadd.s32 %s165, %s163
          %s167 = smul.addr %s166, 2
          %s168 = scalar_lea.vmem %s1, %s167
          %s169 = sadd.s32 %s18, %s20
          %s170 = smul.u32 16, %s169
          %s171 = ssub.s32 1, %s170
          %s172 = smul.u32 32, %s171
        $region24: #{dice_loss.1} parent=15 // pred_fallthru
          _
      $region16: #{dice_loss.1} parent=5 // pred_fallthru
        _
      %p173 = scmp.le.s32.totalorder 1, %s11
      %p174 = scmp.lt.s32.totalorder %s11, 3
      %p175 = pnand %p173, %p174
      %p176 = pneg %p175
      // Predicated region
      $region25: #{dice_loss.1} parent=5 // pred_check
        _
      $region26: #{dice_loss.1} parent=5 // pred_check_branch
        %178 = sbr.rel (%p175) target = $region28
      $region27: #{dice_loss.1} parent=5 // pred_region
        %s179 = ssub.s32 %s11, 1
        %s180 = sadd.s32 %s21, %s23
        %s181 = smul.u32 16, %s180
        %s182 = ssub.s32 1, %s181
        %s183 = smul.u32 32, %s182
        %p184 = scmp.lt.s32.totalorder %s22, 1
        %s185 = scalar_select %p184, %s22, 1
        %p186 = scmp.lt.s32.totalorder %s181, 0
        %s187 = scalar_select %p186, %s181, 0
        %s188 = sadd.s32 %s187, %s185
        %s189 = smul.addr %s188, 2
        %s190 = scalar_lea.vmem %s0, %s189
        %p191 = pneg %p60
        %p192 = pneg %p57
        %s193 = sadd.s32 %s21, %s23
        %s194 = smul.u32 16, %s193
        %s195 = ssub.s32 1, %s194
        %s196 = smul.u32 32, %s195
        %p197 = scmp.lt.s32.totalorder %s22, 1
        %s198 = scalar_select %p197, %s22, 1
        %p199 = scmp.lt.s32.totalorder %s194, 0
        %s200 = scalar_select %p199, %s194, 0
        %s201 = sadd.s32 %s200, %s198
        %s202 = smul.addr %s201, 2
        %s203 = scalar_lea.vmem %s1, %s202
        %p204 = pneg %p90
        %p205 = pneg %p87
        %p206 = pneg %p118
        %p207 = pneg %p115
        %s208 = sand.u32 %s105, 1
        %s209 = scalar_lea.sflag [#allocation5], %s208
        %s210 = sand.u32 %s105, 1
        %s211 = smul.addr %s210, 128
        %s212 = scalar_lea.smem [#allocation4], %s211
        %s213 = sadd.s32 %s21, %s23
        %s214 = smul.u32 16, %s213
        %s215 = ssub.s32 1, %s214
        %s216 = smul.u32 32, %s215
        %p217 = scmp.lt.s32.totalorder %s22, 1
        %s218 = scalar_select %p217, %s22, 1
        %p219 = scmp.lt.s32.totalorder %s214, 0
        %s220 = scalar_select %p219, %s214, 0
        %s221 = sadd.s32 %s220, %s218
        %s222 = smul.addr %s221, 2
        %s223 = scalar_lea.vmem %s0, %s222
        %s224 = sadd.s32 %s21, %s23
        %s225 = smul.u32 16, %s224
        %s226 = ssub.s32 1, %s225
        %s227 = smul.u32 32, %s226
        %s228 = sadd.s32 %s21, %s23
        %s229 = smul.u32 16, %s228
        %s230 = ssub.s32 1, %s229
        %s231 = smul.u32 32, %s230
        %p232 = scmp.lt.s32.totalorder %s22, 1
        %s233 = scalar_select %p232, %s22, 1
        %p234 = scmp.lt.s32.totalorder %s229, 0
        %s235 = scalar_select %p234, %s229, 0
        %s236 = sadd.s32 %s235, %s233
        %s237 = smul.addr %s236, 2
        %s238 = scalar_lea.vmem %s1, %s237
        %s239 = sadd.s32 %s21, %s23
        %s240 = smul.u32 16, %s239
        %s241 = ssub.s32 1, %s240
        %s242 = smul.u32 32, %s241
        %p243 = scmp.eq.s32.totalorder %s23, 0
        // Predicated region
        $region29: #{dice_loss.1} parent=27 // pred_check
          %p244 = pneg %p243
        $region30: #{dice_loss.1} parent=27 // pred_check_branch
          %246 = sbr.rel (%p244) target = $region32
        $region31: #{dice_loss.1} parent=27 // pred_region
          %247 = vst [vmem:[#allocation2] sm:$0xff] 0.0
          %248 = vst [vmem:[#allocation2 + $0x8] sm:$0xff] 0.0
          %249 = vst [vmem:[#allocation2 + $0x10] sm:$0xff] 0.0
          %250 = vst [vmem:[#allocation2 + $0x18] sm:$0xff] 0.0
          %251 = vst [vmem:[#allocation3] sm:$0xff] 0.0
          %252 = vst [vmem:[#allocation3 + $0x8] sm:$0xff] 0.0
          %253 = vst [vmem:[#allocation3 + $0x10] sm:$0xff] 0.0
          %254 = vst [vmem:[#allocation3 + $0x18] sm:$0xff] 0.0
        $region32: #{dice_loss.1} parent=27 // pred_fallthru
          _
        %v255 = vld [vmem:[%s223] sm:$0xff]
        %v256 = vld [vmem:[%s223 + $0x8] sm:$0xff]
        %v257 = vld [vmem:[%s223 + $0x10] sm:$0xff]
        %v258 = vld [vmem:[%s223 + $0x18] sm:$0xff]
        %v259 = vxor.u32 %v255, 2147483648
        %v260 = vxor.u32 %v256, 2147483648
        %v261 = vxor.u32 %v257, 2147483648
        %v262 = vxor.u32 %v258, 2147483648
        %v263 = vmul.f32 %v259, 1.442695
        %v264 = vpow.pop %v263
        %v265 = vmul.f32 %v260, 1.442695
        %v266 = vpow.pop %v265
        %v267 = vmul.f32 %v261, 1.442695
        %v268 = vpow.pop %v267
        %v269 = vmul.f32 %v262, 1.442695
        %v270 = vpow.pop %v269
        %v271 = vadd.f32 %v264, 1.0
        %v272 = vadd.f32 %v266, 1.0
        %v273 = vadd.f32 %v268, 1.0
        %v274 = vadd.f32 %v270, 1.0
        %v275 = vrcp.pop %v271
        %v276 = vmul.f32 1.0, %v275
        %v277 = vrcp.pop %v272
        %v278 = vmul.f32 1.0, %v277
        %v279 = vrcp.pop %v273
        %v280 = vmul.f32 1.0, %v279
        %v281 = vrcp.pop %v274
        %v282 = vmul.f32 1.0, %v281
        %v283 = vld [vmem:[%s238] sm:$0xff]
        %v284 = vld [vmem:[%s238 + $0x8] sm:$0xff]
        %v285 = vld [vmem:[%s238 + $0x10] sm:$0xff]
        %v286 = vld [vmem:[%s238 + $0x18] sm:$0xff]
        %s287 = sadd.s32 %s21, %s23
        %v288 = vlaneseq
        %v289 = vshrl.u32 %v288, 7
        %v290 = vadd.s32 %v289, 8
        %v291 = vadd.s32 %v289, 16
        %v292 = vadd.s32 %v289, 24
        %v293 = vlaneseq
        %v294 = vand.u32 %v293, 127
        %s295 = smul.u32 %s287, 32
        %v296 = vstv %s295
        %v297 = vadd.s32 %v296, %v289
        %v298 = vadd.s32 %v296, %v290
        %v299 = vadd.s32 %v296, %v291
        %v300 = vadd.s32 %v296, %v292
        %v301 = vmul.u32 %v297, 128
        %v302 = vmul.u32 %v298, 128
        %v303 = vmul.u32 %v299, 128
        %v304 = vmul.u32 %v300, 128
        %v305 = vadd.s32 %v301, %v294
        %v306 = vadd.s32 %v302, %v294
        %v307 = vadd.s32 %v303, %v294
        %v308 = vadd.s32 %v304, %v294
        %vm309 = vcmp.lt.s32.totalorder %v305, 256
        %vm310 = vcmp.lt.s32.totalorder %v306, 256
        %vm311 = vcmp.lt.s32.totalorder %v307, 256
        %vm312 = vcmp.lt.s32.totalorder %v308, 256
        %v313 = vsel %vm309, %v276, 0.0
        %v314 = vsel %vm310, %v278, 0.0
        %v315 = vsel %vm311, %v280, 0.0
        %v316 = vsel %vm312, %v282, 0.0
        %v317 = vsel %vm309, %v283, 0.0
        %v318 = vsel %vm310, %v284, 0.0
        %v319 = vsel %vm311, %v285, 0.0
        %v320 = vsel %vm312, %v286, 0.0
        %v321 = vld [vmem:[#allocation2] sm:$0xff]
        %v322 = vld [vmem:[#allocation2 + $0x8] sm:$0xff]
        %v323 = vld [vmem:[#allocation2 + $0x10] sm:$0xff]
        %v324 = vld [vmem:[#allocation2 + $0x18] sm:$0xff]
        %v325 = vmul.f32 %v313, %v317
        %v326 = vmul.f32 %v314, %v318
        %v327 = vmul.f32 %v315, %v319
        %v328 = vmul.f32 %v316, %v320
        %v329 = vadd.f32 %v325, 0.0
        %v330 = vadd.f32 %v326, 0.0
        %v331 = vadd.f32 %v327, 0.0
        %v332 = vadd.f32 %v328, 0.0
        %v333 = vadd.f32 %v321, %v329
        %v334 = vadd.f32 %v322, %v330
        %v335 = vadd.f32 %v323, %v331
        %v336 = vadd.f32 %v324, %v332
        %337 = vst [vmem:[#allocation2] sm:$0xff] %v333
        %338 = vst [vmem:[#allocation2 + $0x8] sm:$0xff] %v334
        %339 = vst [vmem:[#allocation2 + $0x10] sm:$0xff] %v335
        %340 = vst [vmem:[#allocation2 + $0x18] sm:$0xff] %v336
        %v341 = vld [vmem:[#allocation3] sm:$0xff]
        %v342 = vld [vmem:[#allocation3 + $0x8] sm:$0xff]
        %v343 = vld [vmem:[#allocation3 + $0x10] sm:$0xff]
        %v344 = vld [vmem:[#allocation3 + $0x18] sm:$0xff]
        %v345 = vadd.f32 %v313, %v317
        %v346 = vadd.f32 %v314, %v318
        %v347 = vadd.f32 %v315, %v319
        %v348 = vadd.f32 %v316, %v320
        %v349 = vadd.f32 %v345, 0.0
        %v350 = vadd.f32 %v346, 0.0
        %v351 = vadd.f32 %v347, 0.0
        %v352 = vadd.f32 %v348, 0.0
        %v353 = vadd.f32 %v341, %v349
        %v354 = vadd.f32 %v342, %v350
        %v355 = vadd.f32 %v343, %v351
        %v356 = vadd.f32 %v344, %v352
        %357 = vst [vmem:[#allocation3] sm:$0xff] %v353
        %358 = vst [vmem:[#allocation3 + $0x8] sm:$0xff] %v354
        %359 = vst [vmem:[#allocation3 + $0x10] sm:$0xff] %v355
        %360 = vst [vmem:[#allocation3 + $0x18] sm:$0xff] %v356
        // Predicated region
        $region33: #{dice_loss.1} parent=27 // pred_check
          %p361 = pneg %p243
        $region34: #{dice_loss.1} parent=27 // pred_check_branch
          %363 = sbr.rel (%p361) target = $region36
        $region35: #{dice_loss.1} parent=27 // pred_region
          %v364 = vld [vmem:[#allocation2] sm:$0xff]
          %v365 = vld [vmem:[#allocation2 + $0x8] sm:$0xff]
          %v366 = vld [vmem:[#allocation2 + $0x10] sm:$0xff]
          %v367 = vld [vmem:[#allocation2 + $0x18] sm:$0xff]
          %v368 = vadd.f32 %v364, %v365
          %v369 = vadd.f32 %v368, %v366
          %v370 = vadd.f32 %v369, %v367
          %371 = vadd.xlane.f32.xlu0 %v370
          %v372 = vpop.xlane.xlu0 %371
          %v373 = vrot.slane %v372, 4
          %v374 = vadd.f32 %v372, %v373
          %v375 = vrot.slane %v374, 2
          %v376 = vadd.f32 %v374, %v375
          %v377 = vrot.slane %v376, 1
          %v378 = vadd.f32 %v376, %v377
          %s379 = vtos %v378
          %s380 = scalar_lea.smem %s212, 0 [#allocation4]
          %381 = sst [smem:[%s380]] %s379
          %v382 = vld [vmem:[#allocation3] sm:$0xff]
          %v383 = vld [vmem:[#allocation3 + $0x8] sm:$0xff]
          %v384 = vld [vmem:[#allocation3 + $0x10] sm:$0xff]
          %v385 = vld [vmem:[#allocation3 + $0x18] sm:$0xff]
          %v386 = vadd.f32 %v382, %v383
          %v387 = vadd.f32 %v386, %v384
          %v388 = vadd.f32 %v387, %v385
          %389 = vadd.xlane.f32.xlu0 %v388
          %v390 = vpop.xlane.xlu0 %389
          %v391 = vrot.slane %v390, 4
          %v392 = vadd.f32 %v390, %v391
          %v393 = vrot.slane %v392, 2
          %v394 = vadd.f32 %v392, %v393
          %v395 = vrot.slane %v394, 1
          %v396 = vadd.f32 %v394, %v395
          %s397 = vtos %v396
          %s398 = scalar_lea.smem %s212, 1 [#allocation4]
          %399 = sst [smem:[%s398]] %s397
        $region36: #{dice_loss.1} parent=27 // pred_fallthru
          _
        %s400 = sand.u32 %s105, 1
        %s401 = scalar_lea.sflag [#allocation5], %s400
        %s402 = sand.u32 %s105, 1
        %s403 = smul.addr %s402, 128
        %s404 = scalar_lea.smem [#allocation4], %s403
        // Predicated region
        $region37: #{dice_loss.1} parent=27 // pred_check
          %p405 = pneg %p115
        $region38: #{dice_loss.1} parent=27 // pred_check_branch
          %407 = sbr.rel (%p405) target = $region40
        $region39: #{dice_loss.1} parent=27 // pred_region
          %s409 = ssub.s32 16, 16
          %410 = vsyncadd %s401, %s409
          %s411 = sadd.s32 %s21, %s22
          %s412 = scalar_lea.vmem %s2, %s411
          %s414 = sshll.u32 %s412, 4
          %s415 = int_to_ptr.vmem [resolvable:$true] %s414
          %417 = dma.smem_to_vmem %s404, 16, %s415, %s401
        $region40: #{dice_loss.1} parent=27 // pred_fallthru
          _
      $region28: #{dice_loss.1} parent=5 // pred_fallthru
        _
      %p418 = scmp.le.s32.totalorder 2, %s11
      // Predicated region
      $region41: #{dice_loss.1} parent=5 // pred_check
        %p419 = pneg %p418
      $region42: #{dice_loss.1} parent=5 // pred_check_branch
        %421 = sbr.rel (%p419) target = $region44
      $region43: #{dice_loss.1} parent=5 // pred_region
        %s422 = ssub.s32 %s11, 2
        // Predicated region
        $region45: #{dice_loss.1} parent=43 // pred_check
          %p423 = pneg %p121
        $region46: #{dice_loss.1} parent=43 // pred_check_branch
          %425 = sbr.rel (%p423) target = $region48
        $region47: #{dice_loss.1} parent=43 // pred_region
          %s426 = sand.u32 %s106, 1
          %s427 = scalar_lea.sflag [#allocation5], %s426
          %s428 = sand.u32 %s106, 1
          %s429 = smul.addr %s428, 128
          %s430 = scalar_lea.smem [#allocation4], %s429
          %431 = dma.done %s427, 16
        $region48: #{dice_loss.1} parent=43 // pred_fallthru
          _
        %432 = sfence
      $region44: #{dice_loss.1} parent=5 // pred_fallthru
        _
    $region6: #{dice_loss.1} parent=1 // loop_footer
      %s15 = sadd.s32 1, %s11
    $region7: #{dice_loss.1} parent=1 // loop_footer_branch
      %10 = sbr.rel target = $region3
    $region8: #{dice_loss.1} parent=1 // loop_exit
      _
    %433 = vsyncpa [#allocation5], 1
    %s434 = scalar_lea.sflag [#allocation5], 1
    %435 = vsyncpa %s434, 1

</llo_original>
